<compile_context>
chip_gen: v5e
topology: v5e:2x2
jax: 0.10.0
libtpu: 0.0.40
codegen_flags: <defaults>
</compile_context>

<pallas_src>
import functools

import jax
import jax.numpy as jnp
import numpy as np
from jax import lax
from jax.experimental import pallas as pl
from jax.experimental.pallas import tpu as pltpu


# ----------------------------------------------------------------------------
# Pass 1: q/k projections + per-branch channel-attention logits accumulated
#         over HW tiles; softmax + Wpr fold at the last tile.
#         Output: (bs, 2, C, C) = Wpr @ softmax(scale * logits) per branch.
# ----------------------------------------------------------------------------
def _qk_att_kernel(blur_ref, event_ref, wb_ref, bb_ref, we_ref, be_ref,
                   wpr_ref, att_ref, *, dim, scale, n_branch, hw_axis,
                   compute_dtype):
    C = dim
    h = pl.program_id(hw_axis)

    def mm(a, b):                       # a @ b
        return lax.dot_general(a.astype(compute_dtype), b.astype(compute_dtype),
                               (((1,), (0,)), ((), ())),
                               preferred_element_type=jnp.float32)

    def mm_t(a, b):                     # a @ b.T  (contract the HW-tile axis)
        return lax.dot_general(a.astype(compute_dtype), b.astype(compute_dtype),
                               (((1,), (1,)), ((), ())),
                               preferred_element_type=jnp.float32)

    @pl.when(h == 0)
    def _():
        att_ref[...] = jnp.zeros_like(att_ref)

    x_blur = blur_ref[0]                # (C, thw)
    x_event = event_ref[0]              # (C, thw)

    # Branch 0: blur_k . event_q^T ; branch 1: blur_q . event_k^T.
    # Split (per-branch) grams: no wasted MXU blocks, no misaligned slices.
    for r in range(n_branch):
        bp = jnp.maximum(mm(wb_ref[r], x_blur) + bb_ref[r], 0.0)    # Conv+BN+ReLU
        ep = jnp.maximum(mm(we_ref[r], x_event) + be_ref[r], 0.0)
        att_ref[0, r] += mm_t(bp, ep)                               # (C, C)

    @pl.when(h == pl.num_programs(hw_axis) - 1)
    def _():
        for r in range(n_branch):
            logits = att_ref[0, r] * scale
            m = jnp.max(logits, axis=-1, keepdims=True)
            e = jnp.exp(logits - m)
            att = e / jnp.sum(e, axis=-1, keepdims=True)   # exact divide (tiny)
            # Fold blur_project: A_r = Wpr @ att_r (f32, (C,C)@(C,C), once/batch).
            att_ref[0, r] = lax.dot_general(
                wpr_ref[...], att, (((1,), (0,)), ((), ())),
                preferred_element_type=jnp.float32)


# ----------------------------------------------------------------------------
# Pass 2 (fully parallel over batch x HW tiles): v projections, folded
#         attention matmuls, residual, split gate logits, gate softmax, fusion.
# ----------------------------------------------------------------------------
def _fuse_kernel(att_ref, blur_ref, event_ref, wv_ref, bv_ref, bpr_ref,
                 wg_ref, bg_ref, out_ref, *, compute_dtype):
    def mm(a, b):
        return lax.dot_general(a.astype(compute_dtype), b.astype(compute_dtype),
                               (((1,), (0,)), ((), ())),
                               preferred_element_type=jnp.float32)

    x_blur = blur_ref[0]                # (C, thw)
    x_event = event_ref[0]

    blur_v = mm(wv_ref[0], x_blur) + bv_ref[0]      # plain 1x1 conv (no ReLU)
    event_v = mm(wv_ref[1], x_event) + bv_ref[1]

    # blur_project already folded into the attention (pass 1) -> one matmul +
    # bias + residual per branch, no (C, 2*thw) intermediates.
    blur_out = mm(att_ref[0, 0], blur_v) + bpr_ref[...] + x_blur
    event_out = mm(att_ref[0, 1], event_v) + bpr_ref[...] + x_event

    # Gate logits, fully split: no (2C, thw) sublane concat, no 2C slices.
    # wg_ref = [Wgb[:, :C], Wgb[:, C:], Wge[:, :C], Wge[:, C:]], bg_ref = [bgb, bge].
    av_b = mm(wg_ref[0], blur_out) + mm(wg_ref[1], event_out) + bg_ref[0]
    av_e = mm(wg_ref[2], blur_out) + mm(wg_ref[3], event_out) + bg_ref[1]

    # Softmax over the 2C concatenated gate channels, done as two C-row
    # reductions combined elementwise (vreg-aligned for any C).
    m = jnp.maximum(jnp.max(av_b, axis=0, keepdims=True),
                    jnp.max(av_e, axis=0, keepdims=True))
    e_b = jnp.exp(av_b - m)
    e_e = jnp.exp(av_e - m)
    inv = pl.reciprocal(jnp.sum(e_b, axis=0, keepdims=True)
                        + jnp.sum(e_e, axis=0, keepdims=True), approx=True)

    out_ref[0] = (blur_out * (e_b * inv)
                  + event_out * (e_e * inv)).astype(out_ref.dtype)


# ----------------------------------------------------------------------------
# Generation-aware sizing helpers
# ----------------------------------------------------------------------------
def _vmem_capacity_bytes():
    try:
        return int(pltpu.get_tpu_info().vmem_capacity_bytes)
    except Exception:
        return 128 << 20          # conservative default (v5e/v6e class)


def _pick_hw_tile(hw, c, vmem_cap_bytes):
    """Largest multiple-of-128 tile dividing HW, capped per VMEM capacity."""
    if hw % 128 != 0:
        return hw
    if vmem_cap_bytes <= (64 << 20):        # v7x class (64 MiB/TC)
        cap = 1024 if c >= 256 else 2048
    else:                                   # v5e / v6e (128 MiB)
        cap = 2048 if c >= 256 else 4096
    t = 128
    while t * 2 <= cap and hw % (t * 2) == 0:
        t *= 2
    return t


# ----------------------------------------------------------------------------
# Wrapper: NCHW reshape + two pallas_calls
# ----------------------------------------------------------------------------
def spca_attention(blur_nchw, event_nchw, params, *, hw_tile=None,
                   compute_dtype=jnp.bfloat16, cast_inputs=False,
                   qk_input_buffers=None):
    """SPCA_Attention forward (eval mode). Inputs/outputs are NCHW f32.

    compute_dtype: dtype of the MXU matmul operands (accumulation is always
      f32, softmax/gating epilogue is always f32).  bfloat16 default for MXU
      throughput on v5e/v6e/v7x; pass jnp.float32 for bit-tight accuracy.
    cast_inputs: optionally store blur/event as compute_dtype in HBM (halves
      the dominant DMA traffic on memory-bound v5e configs).
    qk_input_buffers: optional pipelining depth (e.g. 3) for the pass-1
      blur/event blocks; worth sweeping 2 vs 3 for small C where the per-tile
      MXU work is tiny and the input DMA can be exposed.
    """
    bs, C, H, Wd = blur_nchw.shape
    HW = H * Wd

    # NCHW -> (B, C, HW): pure reshape (HW on the lane axis), no HBM transpose.
    blur = blur_nchw.reshape(bs, C, HW)
    event = event_nchw.reshape(bs, C, HW)
    if cast_inputs:
        blur = blur.astype(compute_dtype)
        event = event.astype(compute_dtype)

    vmem_cap = _vmem_capacity_bytes()
    if hw_tile is None:
        hw_tile = _pick_hw_tile(HW, C, vmem_cap)
    assert HW % hw_tile == 0, "hw_tile must divide H*W"
    n_hw = HW // hw_tile

    # Per-branch weight stacks: branch 0 -> (blur_k, event_q), 1 -> (blur_q, event_k).
    Wb = jnp.stack([params["Wbk"], params["Wbq"]])                     # (2, C, C)
    bb = jnp.stack([params["bbk"], params["bbq"]])[..., None]          # (2, C, 1)
    We = jnp.stack([params["Weq"], params["Wek"]])
    be = jnp.stack([params["beq"], params["bek"]])[..., None]
    Wpr = params["Wpr"]                                                # (C, C)

    Wv = jnp.stack([params["Wbv"], params["Wev"]])                     # (2, C, C)
    bv = jnp.stack([params["bbv"], params["bev"]])[..., None]          # (2, C, 1)
    bpr = params["bpr"][:, None]                                       # (C, 1)
    Wg = jnp.stack([params["Wgb"][:, :C], params["Wgb"][:, C:],        # (4, C, C)
                    params["Wge"][:, :C], params["Wge"][:, C:]])
    bg = jnp.stack([params["bgb"], params["bge"]])[..., None]          # (2, C, 1)

    # Explicit VMEM budget: intermediates + double-buffered IO blocks, capped
    # per generation (v7x 64 MiB physical vs 128 MiB on v5e/v6e).
    slab = 4 * C * hw_tile
    vmem_cap_limit = (40 << 20) if vmem_cap <= (64 << 20) else (96 << 20)
    vmem_limit = int(min(max(28 * slab + (2 << 20), 8 << 20), vmem_cap_limit))

    scale = C ** (-0.5)
    qk_kwargs = {}
    if qk_input_buffers is not None:
        qk_kwargs = dict(pipeline_mode=pl.Buffered(qk_input_buffers))

    branch_in_grid = (bs % 2 == 1)   # expose a 2nd parallel axis for v7x 2-TC
    if branch_in_grid:
        grid1 = (bs, 2, n_hw)
        in_specs1 = [
            pl.BlockSpec((1, C, hw_tile), lambda b, r, h: (b, 0, h), **qk_kwargs),
            pl.BlockSpec((1, C, hw_tile), lambda b, r, h: (b, 0, h), **qk_kwargs),
            pl.BlockSpec((1, C, C), lambda b, r, h: (r, 0, 0)),
            pl.BlockSpec((1, C, 1), lambda b, r, h: (r, 0, 0)),
            pl.BlockSpec((1, C, C), lambda b, r, h: (r, 0, 0)),
            pl.BlockSpec((1, C, 1), lambda b, r, h: (r, 0, 0)),
            pl.BlockSpec((C, C), lambda b, r, h: (0, 0)),
        ]
        out_specs1 = pl.BlockSpec((1, 1, C, C), lambda b, r, h: (b, r, 0, 0))
        sem1 = ("parallel", "parallel", "arbitrary")
        n_branch, hw_axis = 1, 2
    else:
        grid1 = (bs, n_hw)
        in_specs1 = [
            pl.BlockSpec((1, C, hw_tile), lambda b, h: (b, 0, h), **qk_kwargs),
            pl.BlockSpec((1, C, hw_tile), lambda b, h: (b, 0, h), **qk_kwargs),
            pl.BlockSpec((2, C, C), lambda b, h: (0, 0, 0)),
            pl.BlockSpec((2, C, 1), lambda b, h: (0, 0, 0)),
            pl.BlockSpec((2, C, C), lambda b, h: (0, 0, 0)),
            pl.BlockSpec((2, C, 1), lambda b, h: (0, 0, 0)),
            pl.BlockSpec((C, C), lambda b, h: (0, 0)),
        ]
        out_specs1 = pl.BlockSpec((1, 2, C, C), lambda b, h: (b, 0, 0, 0))
        sem1 = ("parallel", "arbitrary")
        n_branch, hw_axis = 2, 1

    # Pass 1: folded attention weights (HW reduction axis last, "arbitrary").
    att = pl.pallas_call(
        functools.partial(_qk_att_kernel, dim=C, scale=scale,
                          n_branch=n_branch, hw_axis=hw_axis,
                          compute_dtype=compute_dtype),
        out_shape=jax.ShapeDtypeStruct((bs, 2, C, C), jnp.float32),
        grid_spec=pltpu.PrefetchScalarGridSpec(
            num_scalar_prefetch=0, grid=grid1,
            in_specs=in_specs1, out_specs=out_specs1),
        compiler_params=pltpu.CompilerParams(
            dimension_semantics=sem1, vmem_limit_bytes=vmem_limit),
    )(blur, event, Wb, bb, We, be, Wpr)

    # Pass 2: per-(batch, HW tile) epilogue, fully parallel (megacore-friendly).
    out = pl.pallas_call(
        functools.partial(_fuse_kernel, compute_dtype=compute_dtype),
        out_shape=jax.ShapeDtypeStruct((bs, C, HW), jnp.float32),
        grid_spec=pltpu.PrefetchScalarGridSpec(
            num_scalar_prefetch=0, grid=(bs, n_hw),
            in_specs=[
                pl.BlockSpec((1, 2, C, C), lambda b, h: (b, 0, 0, 0)),
                pl.BlockSpec((1, C, hw_tile), lambda b, h: (b, 0, h)),
                pl.BlockSpec((1, C, hw_tile), lambda b, h: (b, 0, h)),
                pl.BlockSpec((2, C, C), lambda b, h: (0, 0, 0)),
                pl.BlockSpec((2, C, 1), lambda b, h: (0, 0, 0)),
                pl.BlockSpec((C, 1), lambda b, h: (0, 0)),
                pl.BlockSpec((4, C, C), lambda b, h: (0, 0, 0)),
                pl.BlockSpec((2, C, 1), lambda b, h: (0, 0, 0)),
            ],
            out_specs=pl.BlockSpec((1, C, hw_tile), lambda b, h: (b, 0, h)),
        ),
        compiler_params=pltpu.CompilerParams(
            dimension_semantics=("parallel", "parallel"),
            vmem_limit_bytes=vmem_limit),
    )(att, blur, event, Wv, bv, bpr, Wg, bg)

    return out.reshape(bs, C, H, Wd)


# ----------------------------------------------------------------------------
# Deterministic parameter init (Conv+BN fused, eval mode)
# ----------------------------------------------------------------------------
def init_params(key, dim):
    C = dim

    def fused_conv_bn(k):
        kw, kb, kg, kbe, km, kv = jax.random.split(k, 6)
        Wc = 0.2 * jax.random.normal(kw, (C, C), jnp.float32)
        bc = 0.1 * jax.random.normal(kb, (C,), jnp.float32)
        gamma = 1.0 + 0.1 * jax.random.normal(kg, (C,), jnp.float32)
        beta = 0.1 * jax.random.normal(kbe, (C,), jnp.float32)
        mean = 0.1 * jax.random.normal(km, (C,), jnp.float32)
        var = 0.5 + jnp.abs(jax.random.normal(kv, (C,), jnp.float32))
        s = gamma / jnp.sqrt(var + 1e-5)
        return Wc * s[:, None], (bc - mean) * s + beta

    def plain_conv(k, in_c, out_c):
        kw, kb = jax.random.split(k)
        return (0.2 * jax.random.normal(kw, (out_c, in_c), jnp.float32),
                0.1 * jax.random.normal(kb, (out_c,), jnp.float32))

    keys = jax.random.split(key, 9)
    p = {}
    p["Wbq"], p["bbq"] = fused_conv_bn(keys[0])
    p["Wbk"], p["bbk"] = fused_conv_bn(keys[1])
    p["Wbv"], p["bbv"] = plain_conv(keys[2], C, C)
    p["Wpr"], p["bpr"] = plain_conv(keys[3], C, C)   # blur_project (used twice)
    p["Weq"], p["beq"] = fused_conv_bn(keys[4])
    p["Wek"], p["bek"] = fused_conv_bn(keys[5])
    p["Wev"], p["bev"] = plain_conv(keys[6], C, C)
    p["Wgb"], p["bgb"] = plain_conv(keys[7], 2 * C, C)   # gate_blur  (C, 2C)
    p["Wge"], p["bge"] = plain_conv(keys[8], 2 * C, C)   # gate_event (C, 2C)
    # event_project exists in __init__ but is never used in forward -> omitted.
    return p


# ----------------------------------------------------------------------------
# Pure-JAX reference mirroring the torch code path (NCHW) for verification
# ----------------------------------------------------------------------------
def reference(blur, event, p):
    bs, C, H, Wd = blur.shape

    def conv(x, W, b, act=False):
        y = jnp.einsum('oi,bihw->bohw', W, x) + b[None, :, None, None]
        return jnp.maximum(y, 0.0) if act else y

    blur_q = conv(blur, p["Wbq"], p["bbq"], True).reshape(bs, C, -1)
    blur_k = conv(blur, p["Wbk"], p["bbk"], True).reshape(bs, C, -1)
    blur_v = conv(blur, p["Wbv"], p["bbv"]).reshape(bs, C, -1)
    event_q = conv(event, p["Weq"], p["beq"], True).reshape(bs, C, -1)
    event_k = conv(event, p["Wek"], p["bek"], True).reshape(bs, C, -1)
    event_v = conv(event, p["Wev"], p["bev"]).reshape(bs, C, -1)
    scl = C ** (-0.5)

    blur_att = jax.nn.softmax(scl * jnp.einsum('bcp,bdp->bcd', blur_k, event_q), axis=-1)
    blur_out = jnp.einsum('bcd,bdp->bcp', blur_att, blur_v).reshape(bs, C, H, Wd)
    blur_out = conv(blur_out, p["Wpr"], p["bpr"])
    event_att = jax.nn.softmax(scl * jnp.einsum('bcp,bdp->bcd', blur_q, event_k), axis=-1)
    event_out = jnp.einsum('bcd,bdp->bcp', event_att, event_v).reshape(bs, C, H, Wd)
    event_out = conv(event_out, p["Wpr"], p["bpr"])   # blur_project, as in torch

    blur_out = blur_out + blur
    event_out = event_out + event

    cat = jnp.concatenate([blur_out, event_out], axis=1)
    avb = conv(cat, p["Wgb"], p["bgb"])
    ave = conv(cat, p["Wge"], p["bge"])
    av = jax.nn.softmax(jnp.concatenate([avb, ave], axis=1), axis=1)
    return blur_out * av[:, :C] + event_out * av[:, C:]


if __name__ == "__main__":
    key = jax.random.PRNGKey(0)
    dim, bs, H, W = 4, 2, 16, 16
    k1, k2, kp = jax.random.split(key, 3)
    blur = jax.random.normal(k1, (bs, dim, H, W), jnp.float32)
    event = jax.random.normal(k2, (bs, dim, H, W), jnp.float32)
    params = init_params(kp, dim)

    ref = reference(blur, event, params)

    # (1) f32 matmul path, hw_tile=128 -> 2 HW tiles exercises the
    #     accumulate-over-HW reduction.  Only the pass-2 gate softmax uses the
    #     approx EUP reciprocal, so the tolerance is tight.
    out_f32 = jax.block_until_ready(
        spca_attention(blur, event, params, hw_tile=128,
                       compute_dtype=jnp.float32))
    np.testing.assert_allclose(np.asarray(out_f32), np.asarray(ref),
                               rtol=1e-2, atol=1e-2)

    # (2) Default bf16-MXU path (f32 accumulation + f32 epilogue).  With C=4
    #     the contractions are tiny, so bf16 operand rounding dominates ->
    #     looser tolerance; exactness is already established by (1).
    out_bf16 = jax.block_until_ready(
        spca_attention(blur, event, params, hw_tile=128))
    np.testing.assert_allclose(np.asarray(out_bf16), np.asarray(ref),
                               rtol=1e-1, atol=1e-1)

    # (3) bs=1 exercises the branch-parallel pass-1 grid (keeps both v7x
    #     TensorCores busy when the batch axis can't be split).
    out_b1 = jax.block_until_ready(
        spca_attention(blur[:1], event[:1], params, hw_tile=128,
                       compute_dtype=jnp.float32))
    np.testing.assert_allclose(np.asarray(out_b1),
                               np.asarray(reference(blur[:1], event[:1], params)),
                               rtol=1e-2, atol=1e-2)

    print("KERNEL_OK")
</pallas_src>

<mosaic_0001>
module attributes {stable_mosaic.version = 11 : i64} {
  func.func @_qk_att_kernel(%arg0: i32, %arg1: i32, %arg2: memref<1x4x128xf32, #tpu.memory_space<vmem>>, %arg3: memref<1x4x128xf32, #tpu.memory_space<vmem>>, %arg4: memref<2x4x4xf32, #tpu.memory_space<vmem>>, %arg5: memref<2x4x1xf32, #tpu.memory_space<vmem>>, %arg6: memref<2x4x4xf32, #tpu.memory_space<vmem>>, %arg7: memref<2x4x1xf32, #tpu.memory_space<vmem>>, %arg8: memref<4x4xf32, #tpu.memory_space<vmem>>, %arg9: memref<1x2x4x4xf32, #tpu.memory_space<vmem>>) attributes {dimension_semantics = [#tpu.dimension_semantics<parallel>, #tpu.dimension_semantics<arbitrary>], iteration_bounds = array<i64: 2, 2>, scalar_prefetch = 0 : i64, scratch_operands = 0 : i64, tpu.core_type = #tpu.core_type<tc>, window_params = [{transform_indices = @transform_0, window_bounds = array<i64: 1, 4, 128>}, {transform_indices = @transform_1, window_bounds = array<i64: 1, 4, 128>}, {pipeline_mode = #tpu.pipeline_mode<synchronous>, transform_indices = @transform_2, window_bounds = array<i64: 2, 4, 4>}, {pipeline_mode = #tpu.pipeline_mode<synchronous>, transform_indices = @transform_3, window_bounds = array<i64: 2, 4, 1>}, {pipeline_mode = #tpu.pipeline_mode<synchronous>, transform_indices = @transform_4, window_bounds = array<i64: 2, 4, 4>}, {pipeline_mode = #tpu.pipeline_mode<synchronous>, transform_indices = @transform_5, window_bounds = array<i64: 2, 4, 1>}, {pipeline_mode = #tpu.pipeline_mode<synchronous>, transform_indices = @transform_6, window_bounds = array<i64: 4, 4>}, {transform_indices = @transform_7, window_bounds = array<i64: 1, 2, 4, 4>}]} {
    %c0_i32 = arith.constant 0 : i32
    %0 = arith.cmpi eq, %arg1, %c0_i32 : i32
    %1 = arith.extui %0 : i1 to i32
    %c0_i32_0 = arith.constant 0 : i32
    %2 = arith.cmpi ne, %1, %c0_i32_0 : i32
    scf.if %2 {
      %cst_55 = arith.constant 0.000000e+00 : f32
      %60 = vector.broadcast %cst_55 : f32 to vector<1x2x4x4xf32>
      %c0_56 = arith.constant 0 : index
      %c0_57 = arith.constant 0 : index
      %c0_58 = arith.constant 0 : index
      %c0_59 = arith.constant 0 : index
      %61 = vector.load %arg9[%c0_56, %c0_57, %c0_58, %c0_59] : memref<1x2x4x4xf32, #tpu.memory_space<vmem>>, vector<1x2x4x4xf32>
      tpu.vector_store %arg9[%c0_56, %c0_57, %c0_58, %c0_59], %60 {strides = array<i32>} : memref<1x2x4x4xf32, #tpu.memory_space<vmem>>, vector<1x2x4x4xf32>,
    } else {
    }
    %c0 = arith.constant 0 : index
    %c0_1 = arith.constant 0 : index
    %c0_2 = arith.constant 0 : index
    %3 = vector.load %arg2[%c0, %c0_1, %c0_2] : memref<1x4x128xf32, #tpu.memory_space<vmem>>, vector<1x4x128xf32>
    %4 = vector.shape_cast %3 : vector<1x4x128xf32> to vector<4x128xf32>
    %c0_3 = arith.constant 0 : index
    %c0_4 = arith.constant 0 : index
    %c0_5 = arith.constant 0 : index
    %5 = vector.load %arg3[%c0_3, %c0_4, %c0_5] : memref<1x4x128xf32, #tpu.memory_space<vmem>>, vector<1x4x128xf32>
    %6 = vector.shape_cast %5 : vector<1x4x128xf32> to vector<4x128xf32>
    %c0_6 = arith.constant 0 : index
    %c0_7 = arith.constant 0 : index
    %c0_8 = arith.constant 0 : index
    %7 = vector.load %arg4[%c0_6, %c0_7, %c0_8] : memref<2x4x4xf32, #tpu.memory_space<vmem>>, vector<1x4x4xf32>
    %8 = vector.shape_cast %7 : vector<1x4x4xf32> to vector<4x4xf32>
    %cst = arith.constant dense<0.000000e+00> : vector<4x128xf32>
    %9 = tpu.matmul %8, %4, %cst {dimension_numbers = #tpu.dot_dimension_numbers<[1], [0], [0], [1], [0, 0, 1, 1], [], []>} : vector<4x4xf32>, vector<4x128xf32>, vector<4x128xf32> -> vector<4x128xf32>
    %c0_9 = arith.constant 0 : index
    %c0_10 = arith.constant 0 : index
    %c0_11 = arith.constant 0 : index
    %10 = vector.load %arg5[%c0_9, %c0_10, %c0_11] : memref<2x4x1xf32, #tpu.memory_space<vmem>>, vector<1x4x1xf32>
    %11 = vector.shape_cast %10 : vector<1x4x1xf32> to vector<4x1xf32>
    %12 = vector.broadcast %11 : vector<4x1xf32> to vector<4x128xf32>
    %13 = arith.addf %9, %12 : vector<4x128xf32>
    %cst_12 = arith.constant 0.000000e+00 : f32
    %14 = vector.broadcast %cst_12 : f32 to vector<4x128xf32>
    %15 = arith.maximumf %13, %14 : vector<4x128xf32>
    %c0_13 = arith.constant 0 : index
    %c0_14 = arith.constant 0 : index
    %c0_15 = arith.constant 0 : index
    %16 = vector.load %arg6[%c0_13, %c0_14, %c0_15] : memref<2x4x4xf32, #tpu.memory_space<vmem>>, vector<1x4x4xf32>
    %17 = vector.shape_cast %16 : vector<1x4x4xf32> to vector<4x4xf32>
    %cst_16 = arith.constant dense<0.000000e+00> : vector<4x128xf32>
    %18 = tpu.matmul %17, %6, %cst_16 {dimension_numbers = #tpu.dot_dimension_numbers<[1], [0], [0], [1], [0, 0, 1, 1], [], []>} : vector<4x4xf32>, vector<4x128xf32>, vector<4x128xf32> -> vector<4x128xf32>
    %c0_17 = arith.constant 0 : index
    %c0_18 = arith.constant 0 : index
    %c0_19 = arith.constant 0 : index
    %19 = vector.load %arg7[%c0_17, %c0_18, %c0_19] : memref<2x4x1xf32, #tpu.memory_space<vmem>>, vector<1x4x1xf32>
    %20 = vector.shape_cast %19 : vector<1x4x1xf32> to vector<4x1xf32>
    %21 = vector.broadcast %20 : vector<4x1xf32> to vector<4x128xf32>
    %22 = arith.addf %18, %21 : vector<4x128xf32>
    %cst_20 = arith.constant 0.000000e+00 : f32
    %23 = vector.broadcast %cst_20 : f32 to vector<4x128xf32>
    %24 = arith.maximumf %22, %23 : vector<4x128xf32>
    %c0_21 = arith.constant 0 : index
    %c0_22 = arith.constant 0 : index
    %c0_23 = arith.constant 0 : index
    %c0_24 = arith.constant 0 : index
    %25 = vector.load %arg9[%c0_21, %c0_22, %c0_23, %c0_24] : memref<1x2x4x4xf32, #tpu.memory_space<vmem>>, vector<1x1x4x4xf32>
    %26 = vector.shape_cast %25 : vector<1x1x4x4xf32> to vector<4x4xf32>
    %cst_25 = arith.constant dense<0.000000e+00> : vector<4x4xf32>
    %27 = tpu.matmul %15, %24, %cst_25 {dimension_numbers = #tpu.dot_dimension_numbers<[1], [1], [0], [0], [0, 0, 1, 0], [], []>} : vector<4x128xf32>, vector<4x128xf32>, vector<4x4xf32> -> vector<4x4xf32>
    %28 = arith.addf %26, %27 : vector<4x4xf32>
    %c0_26 = arith.constant 0 : index
    %c0_27 = arith.constant 0 : index
    %c0_28 = arith.constant 0 : index
    %c0_29 = arith.constant 0 : index
    %29 = vector.load %arg9[%c0_26, %c0_27, %c0_28, %c0_29] : memref<1x2x4x4xf32, #tpu.memory_space<vmem>>, vector<1x1x4x4xf32>
    %30 = vector.shape_cast %29 : vector<1x1x4x4xf32> to vector<4x4xf32>
    %31 = vector.shape_cast %28 : vector<4x4xf32> to vector<1x1x4x4xf32>
    tpu.vector_store %arg9[%c0_26, %c0_27, %c0_28, %c0_29], %31 {strides = array<i32>} : memref<1x2x4x4xf32, #tpu.memory_space<vmem>>, vector<1x1x4x4xf32>,
    %c1 = arith.constant 1 : index
    %c0_30 = arith.constant 0 : index
    %c0_31 = arith.constant 0 : index
    %32 = vector.load %arg4[%c1, %c0_30, %c0_31] : memref<2x4x4xf32, #tpu.memory_space<vmem>>, vector<1x4x4xf32>
    %33 = vector.shape_cast %32 : vector<1x4x4xf32> to vector<4x4xf32>
    %cst_32 = arith.constant dense<0.000000e+00> : vector<4x128xf32>
    %34 = tpu.matmul %33, %4, %cst_32 {dimension_numbers = #tpu.dot_dimension_numbers<[1], [0], [0], [1], [0, 0, 1, 1], [], []>} : vector<4x4xf32>, vector<4x128xf32>, vector<4x128xf32> -> vector<4x128xf32>
    %c1_33 = arith.constant 1 : index
    %c0_34 = arith.constant 0 : index
    %c0_35 = arith.constant 0 : index
    %35 = vector.load %arg5[%c1_33, %c0_34, %c0_35] : memref<2x4x1xf32, #tpu.memory_space<vmem>>, vector<1x4x1xf32>
    %36 = vector.shape_cast %35 : vector<1x4x1xf32> to vector<4x1xf32>
    %37 = vector.broadcast %36 : vector<4x1xf32> to vector<4x128xf32>
    %38 = arith.addf %34, %37 : vector<4x128xf32>
    %cst_36 = arith.constant 0.000000e+00 : f32
    %39 = vector.broadcast %cst_36 : f32 to vector<4x128xf32>
    %40 = arith.maximumf %38, %39 : vector<4x128xf32>
    %c1_37 = arith.constant 1 : index
    %c0_38 = arith.constant 0 : index
    %c0_39 = arith.constant 0 : index
    %41 = vector.load %arg6[%c1_37, %c0_38, %c0_39] : memref<2x4x4xf32, #tpu.memory_space<vmem>>, vector<1x4x4xf32>
    %42 = vector.shape_cast %41 : vector<1x4x4xf32> to vector<4x4xf32>
    %cst_40 = arith.constant dense<0.000000e+00> : vector<4x128xf32>
    %43 = tpu.matmul %42, %6, %cst_40 {dimension_numbers = #tpu.dot_dimension_numbers<[1], [0], [0], [1], [0, 0, 1, 1], [], []>} : vector<4x4xf32>, vector<4x128xf32>, vector<4x128xf32> -> vector<4x128xf32>
    %c1_41 = arith.constant 1 : index
    %c0_42 = arith.constant 0 : index
    %c0_43 = arith.constant 0 : index
    %44 = vector.load %arg7[%c1_41, %c0_42, %c0_43] : memref<2x4x1xf32, #tpu.memory_space<vmem>>, vector<1x4x1xf32>
    %45 = vector.shape_cast %44 : vector<1x4x1xf32> to vector<4x1xf32>
    %46 = vector.broadcast %45 : vector<4x1xf32> to vector<4x128xf32>
    %47 = arith.addf %43, %46 : vector<4x128xf32>
    %cst_44 = arith.constant 0.000000e+00 : f32
    %48 = vector.broadcast %cst_44 : f32 to vector<4x128xf32>
    %49 = arith.maximumf %47, %48 : vector<4x128xf32>
    %c0_45 = arith.constant 0 : index
    %c1_46 = arith.constant 1 : index
    %c0_47 = arith.constant 0 : index
    %c0_48 = arith.constant 0 : index
    %50 = vector.load %arg9[%c0_45, %c1_46, %c0_47, %c0_48] : memref<1x2x4x4xf32, #tpu.memory_space<vmem>>, vector<1x1x4x4xf32>
    %51 = vector.shape_cast %50 : vector<1x1x4x4xf32> to vector<4x4xf32>
    %cst_49 = arith.constant dense<0.000000e+00> : vector<4x4xf32>
    %52 = tpu.matmul %40, %49, %cst_49 {dimension_numbers = #tpu.dot_dimension_numbers<[1], [1], [0], [0], [0, 0, 1, 0], [], []>} : vector<4x128xf32>, vector<4x128xf32>, vector<4x4xf32> -> vector<4x4xf32>
    %53 = arith.addf %51, %52 : vector<4x4xf32>
    %c0_50 = arith.constant 0 : index
    %c1_51 = arith.constant 1 : index
    %c0_52 = arith.constant 0 : index
    %c0_53 = arith.constant 0 : index
    %54 = vector.load %arg9[%c0_50, %c1_51, %c0_52, %c0_53] : memref<1x2x4x4xf32, #tpu.memory_space<vmem>>, vector<1x1x4x4xf32>
    %55 = vector.shape_cast %54 : vector<1x1x4x4xf32> to vector<4x4xf32>
    %56 = vector.shape_cast %53 : vector<4x4xf32> to vector<1x1x4x4xf32>
    tpu.vector_store %arg9[%c0_50, %c1_51, %c0_52, %c0_53], %56 {strides = array<i32>} : memref<1x2x4x4xf32, #tpu.memory_space<vmem>>, vector<1x1x4x4xf32>,
    %c1_i32 = arith.constant 1 : i32
    %57 = arith.cmpi eq, %arg1, %c1_i32 : i32
    %58 = arith.extui %57 : i1 to i32
    %c0_i32_54 = arith.constant 0 : i32
    %59 = arith.cmpi ne, %58, %c0_i32_54 : i32
    scf.if %59 {
      %c0_55 = arith.constant 0 : index
      %c0_56 = arith.constant 0 : index
      %c0_57 = arith.constant 0 : index
      %c0_58 = arith.constant 0 : index
      %60 = vector.load %arg9[%c0_55, %c0_56, %c0_57, %c0_58] : memref<1x2x4x4xf32, #tpu.memory_space<vmem>>, vector<1x1x4x4xf32>
      %61 = vector.shape_cast %60 : vector<1x1x4x4xf32> to vector<4x4xf32>
      %cst_59 = arith.constant 5.000000e-01 : f32
      %62 = vector.broadcast %cst_59 : f32 to vector<4x4xf32>
      %63 = arith.mulf %61, %62 : vector<4x4xf32>
      %cst_60 = arith.constant dense<0xFF800000> : vector<4xf32>
      %64 = vector.multi_reduction <maximumf>, %63, %cst_60 [1] : vector<4x4xf32> to vector<4xf32>
      %65 = vector.shape_cast %64 : vector<4xf32> to vector<4x1xf32>
      %66 = vector.broadcast %65 : vector<4x1xf32> to vector<4x4xf32>
      %67 = arith.subf %63, %66 : vector<4x4xf32>
      %68 = math.exp %67 : vector<4x4xf32>
      %cst_61 = arith.constant dense<0.000000e+00> : vector<4xf32>
      %69 = vector.multi_reduction <add>, %68, %cst_61 [1] : vector<4x4xf32> to vector<4xf32>
      %70 = vector.shape_cast %69 : vector<4xf32> to vector<4x1xf32>
      %71 = vector.broadcast %70 : vector<4x1xf32> to vector<4x4xf32>
      %72 = arith.divf %68, %71 : vector<4x4xf32>
      %c0_62 = arith.constant 0 : index
      %c0_63 = arith.constant 0 : index
      %73 = vector.load %arg8[%c0_62, %c0_63] : memref<4x4xf32, #tpu.memory_space<vmem>>, vector<4x4xf32>
      %cst_64 = arith.constant dense<0.000000e+00> : vector<4x4xf32>
      %74 = tpu.matmul %73, %72, %cst_64 {dimension_numbers = #tpu.dot_dimension_numbers<[1], [0], [0], [1], [0, 0, 1, 1], [], []>} : vector<4x4xf32>, vector<4x4xf32>, vector<4x4xf32> -> vector<4x4xf32>
      %c0_65 = arith.constant 0 : index
      %c0_66 = arith.constant 0 : index
      %c0_67 = arith.constant 0 : index
      %c0_68 = arith.constant 0 : index
      %75 = vector.load %arg9[%c0_65, %c0_66, %c0_67, %c0_68] : memref<1x2x4x4xf32, #tpu.memory_space<vmem>>, vector<1x1x4x4xf32>
      %76 = vector.shape_cast %75 : vector<1x1x4x4xf32> to vector<4x4xf32>
      %77 = vector.shape_cast %74 : vector<4x4xf32> to vector<1x1x4x4xf32>
      tpu.vector_store %arg9[%c0_65, %c0_66, %c0_67, %c0_68], %77 {strides = array<i32>} : memref<1x2x4x4xf32, #tpu.memory_space<vmem>>, vector<1x1x4x4xf32>,
      %c0_69 = arith.constant 0 : index
      %c1_70 = arith.constant 1 : index
      %c0_71 = arith.constant 0 : index
      %c0_72 = arith.constant 0 : index
      %78 = vector.load %arg9[%c0_69, %c1_70, %c0_71, %c0_72] : memref<1x2x4x4xf32, #tpu.memory_space<vmem>>, vector<1x1x4x4xf32>
      %79 = vector.shape_cast %78 : vector<1x1x4x4xf32> to vector<4x4xf32>
      %cst_73 = arith.constant 5.000000e-01 : f32
      %80 = vector.broadcast %cst_73 : f32 to vector<4x4xf32>
      %81 = arith.mulf %79, %80 : vector<4x4xf32>
      %cst_74 = arith.constant dense<0xFF800000> : vector<4xf32>
      %82 = vector.multi_reduction <maximumf>, %81, %cst_74 [1] : vector<4x4xf32> to vector<4xf32>
      %83 = vector.shape_cast %82 : vector<4xf32> to vector<4x1xf32>
      %84 = vector.broadcast %83 : vector<4x1xf32> to vector<4x4xf32>
      %85 = arith.subf %81, %84 : vector<4x4xf32>
      %86 = math.exp %85 : vector<4x4xf32>
      %cst_75 = arith.constant dense<0.000000e+00> : vector<4xf32>
      %87 = vector.multi_reduction <add>, %86, %cst_75 [1] : vector<4x4xf32> to vector<4xf32>
      %88 = vector.shape_cast %87 : vector<4xf32> to vector<4x1xf32>
      %89 = vector.broadcast %88 : vector<4x1xf32> to vector<4x4xf32>
      %90 = arith.divf %86, %89 : vector<4x4xf32>
      %c0_76 = arith.constant 0 : index
      %c0_77 = arith.constant 0 : index
      %91 = vector.load %arg8[%c0_76, %c0_77] : memref<4x4xf32, #tpu.memory_space<vmem>>, vector<4x4xf32>
      %cst_78 = arith.constant dense<0.000000e+00> : vector<4x4xf32>
      %92 = tpu.matmul %91, %90, %cst_78 {dimension_numbers = #tpu.dot_dimension_numbers<[1], [0], [0], [1], [0, 0, 1, 1], [], []>} : vector<4x4xf32>, vector<4x4xf32>, vector<4x4xf32> -> vector<4x4xf32>
      %c0_79 = arith.constant 0 : index
      %c1_80 = arith.constant 1 : index
      %c0_81 = arith.constant 0 : index
      %c0_82 = arith.constant 0 : index
      %93 = vector.load %arg9[%c0_79, %c1_80, %c0_81, %c0_82] : memref<1x2x4x4xf32, #tpu.memory_space<vmem>>, vector<1x1x4x4xf32>
      %94 = vector.shape_cast %93 : vector<1x1x4x4xf32> to vector<4x4xf32>
      %95 = vector.shape_cast %92 : vector<4x4xf32> to vector<1x1x4x4xf32>
      tpu.vector_store %arg9[%c0_79, %c1_80, %c0_81, %c0_82], %95 {strides = array<i32>} : memref<1x2x4x4xf32, #tpu.memory_space<vmem>>, vector<1x1x4x4xf32>,
    } else {
    }
    return
  }
  func.func @transform_0(%arg0: i32, %arg1: i32) -> (i32, i32, i32) {
    %c0_i32 = arith.constant 0 : i32
    %c0_i32_0 = arith.constant 0 : i32
    return %arg0, %c0_i32, %arg1 : i32, i32, i32
  }
  func.func @transform_1(%arg0: i32, %arg1: i32) -> (i32, i32, i32) {
    %c0_i32 = arith.constant 0 : i32
    %c0_i32_0 = arith.constant 0 : i32
    return %arg0, %c0_i32, %arg1 : i32, i32, i32
  }
  func.func @transform_2(%arg0: i32, %arg1: i32) -> (i32, i32, i32) {
    %c0_i32 = arith.constant 0 : i32
    %c0_i32_0 = arith.constant 0 : i32
    %c0_i32_1 = arith.constant 0 : i32
    %c0_i32_2 = arith.constant 0 : i32
    return %c0_i32, %c0_i32_0, %c0_i32_1 : i32, i32, i32
  }
  func.func @transform_3(%arg0: i32, %arg1: i32) -> (i32, i32, i32) {
    %c0_i32 = arith.constant 0 : i32
    %c0_i32_0 = arith.constant 0 : i32
    %c0_i32_1 = arith.constant 0 : i32
    %c0_i32_2 = arith.constant 0 : i32
    return %c0_i32, %c0_i32_0, %c0_i32_1 : i32, i32, i32
  }
  func.func @transform_4(%arg0: i32, %arg1: i32) -> (i32, i32, i32) {
    %c0_i32 = arith.constant 0 : i32
    %c0_i32_0 = arith.constant 0 : i32
    %c0_i32_1 = arith.constant 0 : i32
    %c0_i32_2 = arith.constant 0 : i32
    return %c0_i32, %c0_i32_0, %c0_i32_1 : i32, i32, i32
  }
  func.func @transform_5(%arg0: i32, %arg1: i32) -> (i32, i32, i32) {
    %c0_i32 = arith.constant 0 : i32
    %c0_i32_0 = arith.constant 0 : i32
    %c0_i32_1 = arith.constant 0 : i32
    %c0_i32_2 = arith.constant 0 : i32
    return %c0_i32, %c0_i32_0, %c0_i32_1 : i32, i32, i32
  }
  func.func @transform_6(%arg0: i32, %arg1: i32) -> (i32, i32) {
    %c0_i32 = arith.constant 0 : i32
    %c0_i32_0 = arith.constant 0 : i32
    %c0_i32_1 = arith.constant 0 : i32
    return %c0_i32, %c0_i32_0 : i32, i32
  }
  func.func @transform_7(%arg0: i32, %arg1: i32) -> (i32, i32, i32, i32) {
    %c0_i32 = arith.constant 0 : i32
    %c0_i32_0 = arith.constant 0 : i32
    %c0_i32_1 = arith.constant 0 : i32
    %c0_i32_2 = arith.constant 0 : i32
    return %arg0, %c0_i32, %c0_i32_0, %c0_i32_1 : i32, i32, i32, i32
  }
}

</mosaic_0001>

<llo_original>
// kernel: tpu_custom_call.1
$region0: #{tpu_custom_call.1}
  #allocation0 [shape = 'u32[]', space=smem, size = 0x4, offset = 0x4, fixed_abs, tag = 'smem constant byte address 0x4 - core index']
  #allocation1 [shape = 'u32[72,128]{1,0:T(1,128)}', space=vmem, size = 0x9000, scoped, tag = 'internal scratch']
  %s0 = inlined_call_operand.vmem [shape: f32[2,4,256], index: 0, kind: input, shape index: {}]
  %s1 = inlined_call_operand.hbm [shape: f32[2,4,256], index: 1, kind: input, shape index: {}]
  %s2 = inlined_call_operand.hbm [shape: f32[2,4,4], index: 2, kind: input, shape index: {}]
  %s3 = inlined_call_operand.vmem [shape: f32[2,4,1], index: 3, kind: input, shape index: {}]
  %s4 = inlined_call_operand.hbm [shape: f32[2,4,4], index: 4, kind: input, shape index: {}]
  %s5 = inlined_call_operand.vmem [shape: f32[2,4,1], index: 5, kind: input, shape index: {}]
  %s6 = inlined_call_operand.hbm [shape: f32[4,4], index: 6, kind: input, shape index: {}]
  %s7 = inlined_call_operand.hbm [shape: f32[2,2,4,4], index: 7, kind: output, shape index: {}]
  %s8 = sld [smem:[#allocation0]]
  $region85: #{tpu_custom_call.1} parent=0
    _
  %s10 = ssub.s32 1, %s8
  %s11 = scalar_select 0, %s10, %s8
  $region1: #{tpu_custom_call.1} parent=0
    #allocation2 [shape = 'u8[4096]{0}', space=vmem, size = 0x1000, scoped, tag = 'input window, operand 1']
    #allocation3 [shape = 's32[2]{0}', space=sflag, size = 0x8, scoped, tag = 'scoped memory for tpu_custom_call.1']
    #allocation4 [shape = 's32[2]{0}', space=sflag, size = 0x8, scoped, tag = 'scoped memory for tpu_custom_call.1']
    #allocation5 [shape = 'u8[4096]{0}', space=vmem, size = 0x1000, scoped, tag = 'input window, operand 2, single buffered']
    #allocation6 [shape = 's32[1]{0}', space=sflag, size = 0x4, scoped, tag = 'scoped memory for tpu_custom_call.1']
    #allocation7 [shape = 'u8[4096]{0}', space=vmem, size = 0x1000, scoped, tag = 'input window, operand 4, single buffered']
    #allocation8 [shape = 'u8[2048]{0}', space=vmem, size = 0x800, scoped, tag = 'input window, operand 6, single buffered']
    #allocation9 [shape = 's32[1]{0}', space=sflag, size = 0x4, scoped, tag = 'scoped memory for tpu_custom_call.1']
    #allocation10 [shape = 'u8[8192]{0}', space=vmem, size = 0x2000, scoped, tag = 'output window, operand 0']
    %12 = vsyncpa [#allocation3], 0
    %s13 = scalar_lea.sflag [#allocation3], 1
    %14 = vsyncpa %s13, 0
    %15 = vsyncpa [#allocation6], 0
    %16 = vsyncpa [#allocation9], 0
    %17 = vsyncpa [#allocation4], 0
    %s18 = scalar_lea.sflag [#allocation4], 1
    %19 = vsyncpa %s18, 0
    loop: start=0, step=1, limit=6
    $region2: #{tpu_custom_call.1} parent=1 // loop_pre_header
      _
    $region3: #{tpu_custom_call.1} parent=1 // loop_header
      %s21 = sphi 0, %s25
      %p22 = scmp.ge.s32.totalorder %s21, 6
      %s28 = sphi 0, %s40
      %s29 = sphi 0, %s36
      %s30 = sphi 0, %s28
      %s31 = sphi 0, %s29
      %s32 = sphi 0, %s30
      %s33 = sphi 0, %s31
      %s45 = sphi 0, %s47
      %s48 = sphi 0, %s45
      %s49 = sphi 0, %s48
      %s65 = sphi 0, %s49
      %s73 = sphi 0, %s75
      %s76 = sphi 0, %s73
      %s77 = sphi 0, %s76
      %s93 = sphi 0, %s77
      %s97 = sphi 0, %s97
      %s99 = sphi 0, %s97
      %s100 = sphi 0, %s99
      %s114 = sphi 0, %s100
      %s118 = sphi 0, %s118
      %s120 = sphi 0, %s118
      %s121 = sphi 0, %s120
      %s135 = sphi 0, %s121
      %s139 = sphi 0, %s139
      %s141 = sphi 0, %s139
      %s142 = sphi 0, %s141
      %s156 = sphi 0, %s142
      %s160 = sphi 0, %s160
      %s162 = sphi 0, %s160
      %s163 = sphi 0, %s162
      %s177 = sphi 0, %s163
      %s181 = sphi 0, %s181
      %s183 = sphi 0, %s181
      %s184 = sphi 0, %s183
      %s198 = sphi 0, %s184
      %s204 = sphi 0, %s206
      %s207 = sphi 0, %s204
      %s208 = sphi 0, %s207
      %s224 = sphi 0, %s208
    $region4: #{tpu_custom_call.1} parent=1 // loop_header_branch
      %24 = sbr.rel (%p22) target = $region8
    $region5: #{tpu_custom_call.1} parent=1 // loop_body
      %s26 = ssub.s32 %s21, 1
      %s27 = ssub.s32 %s21, 2
      %s34 = sadd.s32 1, %s29
      %p35 = scmp.ge.s32.totalorder %s34, 2
      %s36 = scalar_select %p35, 0, %s34
      %s37 = sadd.s32 1, %s28
      %s38 = scalar_select %p35, %s37, %s28
      %p39 = scmp.ge.s32.totalorder %s38, 2
      %s40 = scalar_select %p39, 0, %s38
      %s41 = ssub.s32 %s28, %s40
      %s42 = ssub.s32 %s29, %s36
      %s43 = sor.u32 %s41, %s42
      %p44 = scmp.eq.s32.totalorder %s43, 0
      %s46 = sadd.s32 %s45, 1
      %s47 = scalar_select %p44, %s45, %s46
      %p50 = pneg %p44
      %p51 = scmp.eq.s32.totalorder %s21, 3
      %p52 = por %p50, %p51
      %p53 = scmp.ne.s32.totalorder %s45, %s48
      %p54 = scmp.eq.s32.totalorder %s21, 0
      %p55 = por %p53, %p54
      %p56 = scmp.ne.s32.totalorder %s45, %s48
      %p57 = scmp.eq.s32.totalorder %s26, 3
      %p58 = por %p56, %p57
      %p59 = scmp.ne.s32.totalorder %s48, %s49
      %p60 = scmp.eq.s32.totalorder %s26, 0
      %p61 = por %p59, %p60
      %p62 = scmp.ne.s32.totalorder %s48, %s49
      %p63 = scmp.eq.s32.totalorder %s27, 3
      %p64 = por %p62, %p63
      %p66 = scmp.ne.s32.totalorder %s49, %s65
      %p67 = scmp.eq.s32.totalorder %s27, 0
      %p68 = por %p66, %p67
      %s69 = ssub.s32 %s28, %s40
      %s70 = ssub.s32 %s29, %s36
      %s71 = sor.u32 %s69, %s70
      %p72 = scmp.eq.s32.totalorder %s71, 0
      %s74 = sadd.s32 %s73, 1
      %s75 = scalar_select %p72, %s73, %s74
      %p78 = pneg %p72
      %p79 = scmp.eq.s32.totalorder %s21, 3
      %p80 = por %p78, %p79
      %p81 = scmp.ne.s32.totalorder %s73, %s76
      %p82 = scmp.eq.s32.totalorder %s21, 0
      %p83 = por %p81, %p82
      %p84 = scmp.ne.s32.totalorder %s73, %s76
      %p85 = scmp.eq.s32.totalorder %s26, 3
      %p86 = por %p84, %p85
      %p87 = scmp.ne.s32.totalorder %s76, %s77
      %p88 = scmp.eq.s32.totalorder %s26, 0
      %p89 = por %p87, %p88
      %p90 = scmp.ne.s32.totalorder %s76, %s77
      %p91 = scmp.eq.s32.totalorder %s27, 3
      %p92 = por %p90, %p91
      %p94 = scmp.ne.s32.totalorder %s77, %s93
      %p95 = scmp.eq.s32.totalorder %s27, 0
      %p96 = por %p94, %p95
      %s98 = sadd.s32 %s97, 1
      %p101 = scmp.eq.s32.totalorder %s21, 3
      %p102 = scmp.ne.s32.totalorder %s97, %s99
      %p103 = scmp.eq.s32.totalorder %s21, 0
      %p104 = por %p102, %p103
      %p105 = scmp.ne.s32.totalorder %s97, %s99
      %p106 = scmp.eq.s32.totalorder %s26, 3
      %p107 = por %p105, %p106
      %p108 = scmp.ne.s32.totalorder %s99, %s100
      %p109 = scmp.eq.s32.totalorder %s26, 0
      %p110 = por %p108, %p109
      %p111 = scmp.ne.s32.totalorder %s99, %s100
      %p112 = scmp.eq.s32.totalorder %s27, 3
      %p113 = por %p111, %p112
      %p115 = scmp.ne.s32.totalorder %s100, %s114
      %p116 = scmp.eq.s32.totalorder %s27, 0
      %p117 = por %p115, %p116
      %s119 = sadd.s32 %s118, 1
      %p122 = scmp.eq.s32.totalorder %s21, 3
      %p123 = scmp.ne.s32.totalorder %s118, %s120
      %p124 = scmp.eq.s32.totalorder %s21, 0
      %p125 = por %p123, %p124
      %p126 = scmp.ne.s32.totalorder %s118, %s120
      %p127 = scmp.eq.s32.totalorder %s26, 3
      %p128 = por %p126, %p127
      %p129 = scmp.ne.s32.totalorder %s120, %s121
      %p130 = scmp.eq.s32.totalorder %s26, 0
      %p131 = por %p129, %p130
      %p132 = scmp.ne.s32.totalorder %s120, %s121
      %p133 = scmp.eq.s32.totalorder %s27, 3
      %p134 = por %p132, %p133
      %p136 = scmp.ne.s32.totalorder %s121, %s135
      %p137 = scmp.eq.s32.totalorder %s27, 0
      %p138 = por %p136, %p137
      %s140 = sadd.s32 %s139, 1
      %p143 = scmp.eq.s32.totalorder %s21, 3
      %p144 = scmp.ne.s32.totalorder %s139, %s141
      %p145 = scmp.eq.s32.totalorder %s21, 0
      %p146 = por %p144, %p145
      %p147 = scmp.ne.s32.totalorder %s139, %s141
      %p148 = scmp.eq.s32.totalorder %s26, 3
      %p149 = por %p147, %p148
      %p150 = scmp.ne.s32.totalorder %s141, %s142
      %p151 = scmp.eq.s32.totalorder %s26, 0
      %p152 = por %p150, %p151
      %p153 = scmp.ne.s32.totalorder %s141, %s142
      %p154 = scmp.eq.s32.totalorder %s27, 3
      %p155 = por %p153, %p154
      %p157 = scmp.ne.s32.totalorder %s142, %s156
      %p158 = scmp.eq.s32.totalorder %s27, 0
      %p159 = por %p157, %p158
      %s161 = sadd.s32 %s160, 1
      %p164 = scmp.eq.s32.totalorder %s21, 3
      %p165 = scmp.ne.s32.totalorder %s160, %s162
      %p166 = scmp.eq.s32.totalorder %s21, 0
      %p167 = por %p165, %p166
      %p168 = scmp.ne.s32.totalorder %s160, %s162
      %p169 = scmp.eq.s32.totalorder %s26, 3
      %p170 = por %p168, %p169
      %p171 = scmp.ne.s32.totalorder %s162, %s163
      %p172 = scmp.eq.s32.totalorder %s26, 0
      %p173 = por %p171, %p172
      %p174 = scmp.ne.s32.totalorder %s162, %s163
      %p175 = scmp.eq.s32.totalorder %s27, 3
      %p176 = por %p174, %p175
      %p178 = scmp.ne.s32.totalorder %s163, %s177
      %p179 = scmp.eq.s32.totalorder %s27, 0
      %p180 = por %p178, %p179
      %s182 = sadd.s32 %s181, 1
      %p185 = scmp.eq.s32.totalorder %s21, 3
      %p186 = scmp.ne.s32.totalorder %s181, %s183
      %p187 = scmp.eq.s32.totalorder %s21, 0
      %p188 = por %p186, %p187
      %p189 = scmp.ne.s32.totalorder %s181, %s183
      %p190 = scmp.eq.s32.totalorder %s26, 3
      %p191 = por %p189, %p190
      %p192 = scmp.ne.s32.totalorder %s183, %s184
      %p193 = scmp.eq.s32.totalorder %s26, 0
      %p194 = por %p192, %p193
      %p195 = scmp.ne.s32.totalorder %s183, %s184
      %p196 = scmp.eq.s32.totalorder %s27, 3
      %p197 = por %p195, %p196
      %p199 = scmp.ne.s32.totalorder %s184, %s198
      %p200 = scmp.eq.s32.totalorder %s27, 0
      %p201 = por %p199, %p200
      %s202 = ssub.s32 %s28, %s40
      %p203 = scmp.eq.s32.totalorder %s202, 0
      %s205 = sadd.s32 %s204, 1
      %s206 = scalar_select %p203, %s204, %s205
      %p209 = pneg %p203
      %p210 = scmp.eq.s32.totalorder %s21, 3
      %p211 = por %p209, %p210
      %p212 = scmp.ne.s32.totalorder %s204, %s207
      %p213 = scmp.eq.s32.totalorder %s21, 0
      %p214 = por %p212, %p213
      %p215 = scmp.ne.s32.totalorder %s204, %s207
      %p216 = scmp.eq.s32.totalorder %s26, 3
      %p217 = por %p215, %p216
      %p218 = scmp.ne.s32.totalorder %s207, %s208
      %p219 = scmp.eq.s32.totalorder %s26, 0
      %p220 = por %p218, %p219
      %p221 = scmp.ne.s32.totalorder %s207, %s208
      %p222 = scmp.eq.s32.totalorder %s27, 3
      %p223 = por %p221, %p222
      %p225 = scmp.ne.s32.totalorder %s208, %s224
      %p226 = scmp.eq.s32.totalorder %s27, 0
      %p227 = por %p225, %p226
      %p228 = scmp.le.s32.totalorder 1, %s21
      %p229 = scmp.lt.s32.totalorder %s21, 5
      %p230 = pnand %p228, %p229
      %p231 = pneg %p230
      // Predicated region
      $region9: #{tpu_custom_call.1} parent=5 // pred_check
        _
      $region10: #{tpu_custom_call.1} parent=5 // pred_check_branch
        %233 = sbr.rel (%p230) target = $region12
      $region11: #{tpu_custom_call.1} parent=5 // pred_region
        %s234 = ssub.s32 %s21, 1
        // Predicated region
        $region13: #{tpu_custom_call.1} parent=11 // pred_check
          %p235 = pneg %p110
        $region14: #{tpu_custom_call.1} parent=11 // pred_check_branch
          %237 = sbr.rel (%p235) target = $region16
        $region15: #{tpu_custom_call.1} parent=11 // pred_region
          %239 = vsyncadd [#allocation6], 0
          %s240 = sshll.u32 %s2, 4
          %s241 = int_to_ptr.hbm [resolvable:$true] %s240
          %s242 = sshll.u32 [#allocation5], 4
          %s243 = int_to_ptr.vmem [resolvable:$true] %s242
          %248 = dma.hbm_to_vmem [thread:$0]  %s241, 128, %s243, [#allocation6], 64, 64, 4
        $region16: #{tpu_custom_call.1} parent=11 // pred_fallthru
          _
        // Predicated region
        $region17: #{tpu_custom_call.1} parent=11 // pred_check
          %p249 = pneg %p131
        $region18: #{tpu_custom_call.1} parent=11 // pred_check_branch
          %251 = sbr.rel (%p249) target = $region20
        $region19: #{tpu_custom_call.1} parent=11 // pred_region
          _
        $region20: #{tpu_custom_call.1} parent=11 // pred_fallthru
          _
        // Predicated region
        $region21: #{tpu_custom_call.1} parent=11 // pred_check
          %p252 = pneg %p152
        $region22: #{tpu_custom_call.1} parent=11 // pred_check_branch
          %254 = sbr.rel (%p252) target = $region24
        $region23: #{tpu_custom_call.1} parent=11 // pred_region
          %256 = vsyncadd [#allocation6], 0
          %s257 = sshll.u32 %s4, 4
          %s258 = int_to_ptr.hbm [resolvable:$true] %s257
          %s259 = sshll.u32 [#allocation7], 4
          %s260 = int_to_ptr.vmem [resolvable:$true] %s259
          %265 = dma.hbm_to_vmem [thread:$0]  %s258, 128, %s260, [#allocation6], 64, 64, 4
        $region24: #{tpu_custom_call.1} parent=11 // pred_fallthru
          _
        // Predicated region
        $region25: #{tpu_custom_call.1} parent=11 // pred_check
          %p266 = pneg %p173
        $region26: #{tpu_custom_call.1} parent=11 // pred_check_branch
          %268 = sbr.rel (%p266) target = $region28
        $region27: #{tpu_custom_call.1} parent=11 // pred_region
          _
        $region28: #{tpu_custom_call.1} parent=11 // pred_fallthru
          _
        // Predicated region
        $region29: #{tpu_custom_call.1} parent=11 // pred_check
          %p269 = pneg %p194
        $region30: #{tpu_custom_call.1} parent=11 // pred_check_branch
          %271 = sbr.rel (%p269) target = $region32
        $region31: #{tpu_custom_call.1} parent=11 // pred_region
          %273 = vsyncadd [#allocation9], 0
          %s275 = sshll.u32 %s6, 4
          %s276 = int_to_ptr.hbm [resolvable:$true] %s275
          %s277 = sshll.u32 [#allocation8], 4
          %s278 = int_to_ptr.vmem [resolvable:$true] %s277
          %280 = dma.hbm_to_vmem [thread:$0]  %s276, 64, %s278, [#allocation9]
        $region32: #{tpu_custom_call.1} parent=11 // pred_fallthru
          _
      $region12: #{tpu_custom_call.1} parent=5 // pred_fallthru
        _
      %p281 = scmp.lt.s32.totalorder %s21, 4
      // Predicated region
      $region33: #{tpu_custom_call.1} parent=5 // pred_check
        %p282 = pneg %p281
      $region34: #{tpu_custom_call.1} parent=5 // pred_check_branch
        %284 = sbr.rel (%p282) target = $region36
      $region35: #{tpu_custom_call.1} parent=5 // pred_region
        // Predicated region
        $region37: #{tpu_custom_call.1} parent=35 // pred_check
          %p285 = pneg %p55
        $region38: #{tpu_custom_call.1} parent=35 // pred_check_branch
          %287 = sbr.rel (%p285) target = $region40
        $region39: #{tpu_custom_call.1} parent=35 // pred_region
          %p288 = scmp.lt.s32.totalorder %s28, 1
          %s289 = scalar_select %p288, %s28, 1
          %p290 = scmp.lt.s32.totalorder %s29, 1
          %s291 = scalar_select %p290, %s29, 1
          %s292 = smul.addr %s289, 2
          %s293 = sadd.s32 %s291, %s292
          %s294 = smul.addr %s293, 4
          %s295 = scalar_lea.vmem %s0, %s294
        $region40: #{tpu_custom_call.1} parent=35 // pred_fallthru
          _
        // Predicated region
        $region41: #{tpu_custom_call.1} parent=35 // pred_check
          %p296 = pneg %p83
        $region42: #{tpu_custom_call.1} parent=35 // pred_check_branch
          %298 = sbr.rel (%p296) target = $region44
        $region43: #{tpu_custom_call.1} parent=35 // pred_region
          %s299 = sand.u32 %s73, 1
          %s300 = scalar_lea.sflag [#allocation3], %s299
          %s301 = sand.u32 %s73, 1
          %s302 = smul.addr %s301, 4
          %s303 = scalar_lea.vmem [#allocation2], %s302
          %305 = vsyncadd %s300, 0
          %s306 = smul.addr %s28, 2
          %s307 = sadd.s32 %s29, %s306
          %s308 = smul.addr %s307, 4
          %s309 = scalar_lea.hbm %s1, %s308
          %s311 = sshll.u32 %s309, 4
          %s312 = int_to_ptr.hbm [resolvable:$true] %s311
          %s313 = sshll.u32 %s303, 4
          %s314 = int_to_ptr.vmem [resolvable:$true] %s313
          %316 = dma.hbm_to_vmem [thread:$0]  %s312, 64, %s314, %s300
        $region44: #{tpu_custom_call.1} parent=35 // pred_fallthru
          _
      $region36: #{tpu_custom_call.1} parent=5 // pred_fallthru
        _
      %p317 = scmp.le.s32.totalorder 1, %s21
      %p318 = scmp.lt.s32.totalorder %s21, 5
      %p319 = pnand %p317, %p318
      %p320 = pneg %p319
      // Predicated region
      $region45: #{tpu_custom_call.1} parent=5 // pred_check
        _
      $region46: #{tpu_custom_call.1} parent=5 // pred_check_branch
        %322 = sbr.rel (%p319) target = $region48
      $region47: #{tpu_custom_call.1} parent=5 // pred_region
        %s323 = ssub.s32 %s21, 1
        %s324 = sand.u32 %s76, 1
        %s325 = scalar_lea.sflag [#allocation3], %s324
        %s326 = sand.u32 %s76, 1
        %s327 = smul.addr %s326, 4
        %s328 = scalar_lea.vmem [#allocation2], %s327
        // Predicated region
        $region49: #{tpu_custom_call.1} parent=47 // pred_check
          %p329 = pneg %p89
        $region50: #{tpu_custom_call.1} parent=47 // pred_check_branch
          %331 = sbr.rel (%p329) target = $region52
        $region51: #{tpu_custom_call.1} parent=47 // pred_region
          %333 = dma.done %s325, 64
        $region52: #{tpu_custom_call.1} parent=47 // pred_fallthru
          _
        // Predicated region
        $region53: #{tpu_custom_call.1} parent=47 // pred_check
          %p334 = pneg %p110
        $region54: #{tpu_custom_call.1} parent=47 // pred_check_branch
          %336 = sbr.rel (%p334) target = $region56
        $region55: #{tpu_custom_call.1} parent=47 // pred_region
          %338 = dma.done [#allocation6], 128
        $region56: #{tpu_custom_call.1} parent=47 // pred_fallthru
          _
        // Predicated region
        $region57: #{tpu_custom_call.1} parent=47 // pred_check
          %p339 = pneg %p152
        $region58: #{tpu_custom_call.1} parent=47 // pred_check_branch
          %341 = sbr.rel (%p339) target = $region60
        $region59: #{tpu_custom_call.1} parent=47 // pred_region
          %343 = dma.done [#allocation6], 128
        $region60: #{tpu_custom_call.1} parent=47 // pred_fallthru
          _
        // Predicated region
        $region61: #{tpu_custom_call.1} parent=47 // pred_check
          %p344 = pneg %p194
        $region62: #{tpu_custom_call.1} parent=47 // pred_check_branch
          %346 = sbr.rel (%p344) target = $region64
        $region63: #{tpu_custom_call.1} parent=47 // pred_region
          %348 = dma.done [#allocation9], 64
        $region64: #{tpu_custom_call.1} parent=47 // pred_fallthru
          _
        %p349 = scmp.lt.s32.totalorder %s30, 1
        %s350 = scalar_select %p349, %s30, 1
        %p351 = scmp.lt.s32.totalorder %s31, 1
        %s352 = scalar_select %p351, %s31, 1
        %s353 = smul.addr %s350, 2
        %s354 = sadd.s32 %s352, %s353
        %s355 = smul.addr %s354, 4
        %s356 = scalar_lea.vmem %s0, %s355
        %p357 = pneg %p61
        %p358 = pneg %p58
        %s359 = sand.u32 %s76, 1
        %s360 = scalar_lea.sflag [#allocation3], %s359
        %s361 = sand.u32 %s76, 1
        %s362 = smul.addr %s361, 4
        %s363 = scalar_lea.vmem [#allocation2], %s362
        %p364 = pneg %p89
        %p365 = pneg %p86
        %p366 = pneg %p110
        %p367 = pneg %p107
        %p368 = pneg %p131
        %p369 = pneg %p128
        %p370 = pneg %p152
        %p371 = pneg %p149
        %p372 = pneg %p173
        %p373 = pneg %p170
        %p374 = pneg %p194
        %p375 = pneg %p191
        %p376 = pneg %p220
        %p377 = pneg %p217
        %s378 = sand.u32 %s207, 1
        %s379 = scalar_lea.sflag [#allocation4], %s378
        %s380 = sand.u32 %s207, 1
        %s381 = smul.addr %s380, 8
        %s382 = scalar_lea.vmem [#allocation10], %s381
        %p383 = scmp.lt.s32.totalorder %s30, 1
        %s384 = scalar_select %p383, %s30, 1
        %p385 = scmp.lt.s32.totalorder %s31, 1
        %s386 = scalar_select %p385, %s31, 1
        %s387 = smul.addr %s384, 2
        %s388 = sadd.s32 %s386, %s387
        %s389 = smul.addr %s388, 4
        %s390 = scalar_lea.vmem %s0, %s389
        %p391 = scmp.eq.s32.totalorder %s31, 0
        // Predicated region
        $region65: #{tpu_custom_call.1} parent=47 // pred_check
          %p392 = pneg %p391
        $region66: #{tpu_custom_call.1} parent=47 // pred_check_branch
          %394 = sbr.rel (%p392) target = $region68
        $region67: #{tpu_custom_call.1} parent=47 // pred_region
          %vm395 = vcmask 27648
          %396 = vst.msk [vmem:[%s382] sm:$0xf] %vm395, 0.0
          %397 = vst.msk [vmem:[%s382 + $0x4] sm:$0xf] %vm395, 0.0
        $region68: #{tpu_custom_call.1} parent=47 // pred_fallthru
          _
        %v398 = vld [vmem:[%s390] sm:$0xf]
        %v399 = vld [vmem:[%s328] sm:$0xf]
        %v400 = vld [vmem:[#allocation5] sm:$0xf]
        %v401 = vld [vmem:[%s3] sm:$0xf]
        %403 = vset.pattern.permute.xlu0 0
        %404 = vperm.xlu0 %403, %v401
        %v405 = vpop.permute.xlu0 %404
        %vm407 = vcmask 31744
        %v409 = vsel %vm407, %v400, 0
        %vm411 = vcmask 1043456
        %v413 = vsel %vm411, %v398, 0
        %415 = vmatpush.msra.mxu0 0.0
        %416 = vmatpush.msra.mxu0 0.0
        %417 = vmatpush.msra.mxu0 0.0
        %418 = vmatpush.msra.mxu0 0.0
        %419 = vmatpush.msra.mxu0 0.0
        %420 = vmatpush.msra.mxu0 0.0
        %421 = vmatpush.msra.mxu0 0.0
        %422 = vmatpush.msra.mxu0 0.0
        %423 = vmatpush.msra.mxu0 0.0
        %424 = vmatpush.msra.mxu0 0.0
        %425 = vmatpush.msra.mxu0 0.0
        %426 = vmatpush.msra.mxu0 0.0
        %427 = vmatpush.msra.mxu0 0.0
        %428 = vmatpush.msra.mxu0 0.0
        %429 = vmatpush.msra.mxu0 0.0
        %430 = vmatpush.msra.mxu0 %v413
        %431 = vmatmul.f32.gmra.mxu0 %v409
        %v432 = vpop.f32.mrf.mxu0
        %v433 = vadd.f32 %v405, %v432
        %434 = vdwg.mxu0
        %v435 = vmax.f32 %v433, 0.0
        %v436 = vld [vmem:[#allocation7] sm:$0xf]
        %v437 = vld [vmem:[%s5] sm:$0xf]
        %439 = vset.pattern.permute.xlu0 0
        %440 = vperm.xlu0 %439, %v437
        %v441 = vpop.permute.xlu0 %440
        %v444 = vsel %vm407, %v436, 0
        %v447 = vsel %vm411, %v399, 0
        %449 = vmatpush.msra.mxu0 0.0
        %450 = vmatpush.msra.mxu0 0.0
        %451 = vmatpush.msra.mxu0 0.0
        %452 = vmatpush.msra.mxu0 0.0
        %453 = vmatpush.msra.mxu0 0.0
        %454 = vmatpush.msra.mxu0 0.0
        %455 = vmatpush.msra.mxu0 0.0
        %456 = vmatpush.msra.mxu0 0.0
        %457 = vmatpush.msra.mxu0 0.0
        %458 = vmatpush.msra.mxu0 0.0
        %459 = vmatpush.msra.mxu0 0.0
        %460 = vmatpush.msra.mxu0 0.0
        %461 = vmatpush.msra.mxu0 0.0
        %462 = vmatpush.msra.mxu0 0.0
        %463 = vmatpush.msra.mxu0 0.0
        %464 = vmatpush.msra.mxu0 %v447
        %465 = vmatmul.f32.gmra.mxu0 %v444
        %v466 = vpop.f32.mrf.mxu0
        %v467 = vadd.f32 %v441, %v466
        %468 = vdwg.mxu0
        %v469 = vmax.f32 %v467, 0.0
        %v470 = vld [vmem:[%s382] sm:$0xf]
        %471 = vmatpush.xpose.msra.mxu0 0.0
        %472 = vmatpush.xpose.msra.mxu0 0.0
        %473 = vmatpush.xpose.msra.mxu0 0.0
        %474 = vmatpush.xpose.msra.mxu0 0.0
        %475 = vmatpush.xpose.msra.mxu0 0.0
        %476 = vmatpush.xpose.msra.mxu0 0.0
        %477 = vmatpush.xpose.msra.mxu0 0.0
        %478 = vmatpush.xpose.msra.mxu0 0.0
        %479 = vmatpush.xpose.msra.mxu0 0.0
        %480 = vmatpush.xpose.msra.mxu0 0.0
        %481 = vmatpush.xpose.msra.mxu0 0.0
        %482 = vmatpush.xpose.msra.mxu0 0.0
        %483 = vmatpush.xpose.msra.mxu0 0.0
        %484 = vmatpush.xpose.msra.mxu0 0.0
        %485 = vmatpush.xpose.msra.mxu0 0.0
        %486 = vmatpush.xpose.msra.mxu0 %v469
        %487 = vmatmul.f32.gmra.mxu0 %v435
        %v488 = vpop.f32.mrf.mxu0
        %v489 = vadd.f32 0.0, %v488
        %490 = vdwg.mxu0
        %v491 = vadd.f32 %v470, %v489
        %vm492 = vcmask 27648
        %493 = vst.msk [vmem:[%s382] sm:$0xf] %vm492, %v491
        %s494 = scalar_lea.vmem [#allocation5], 4
        %v495 = vld [vmem:[%s494] sm:$0xf]
        %s496 = scalar_lea.vmem %s3, 4
        %v497 = vld [vmem:[%s496] sm:$0xf]
        %499 = vset.pattern.permute.xlu0 0
        %500 = vperm.xlu0 %499, %v497
        %v501 = vpop.permute.xlu0 %500
        %v504 = vsel %vm407, %v495, 0
        %506 = vmatpush.msra.mxu0 0.0
        %507 = vmatpush.msra.mxu0 0.0
        %508 = vmatpush.msra.mxu0 0.0
        %509 = vmatpush.msra.mxu0 0.0
        %510 = vmatpush.msra.mxu0 0.0
        %511 = vmatpush.msra.mxu0 0.0
        %512 = vmatpush.msra.mxu0 0.0
        %513 = vmatpush.msra.mxu0 0.0
        %514 = vmatpush.msra.mxu0 0.0
        %515 = vmatpush.msra.mxu0 0.0
        %516 = vmatpush.msra.mxu0 0.0
        %517 = vmatpush.msra.mxu0 0.0
        %518 = vmatpush.msra.mxu0 0.0
        %519 = vmatpush.msra.mxu0 0.0
        %520 = vmatpush.msra.mxu0 0.0
        %521 = vmatpush.msra.mxu0 %v413
        %522 = vmatmul.f32.gmra.mxu0 %v504
        %v523 = vpop.f32.mrf.mxu0
        %v524 = vadd.f32 %v501, %v523
        %525 = vdwg.mxu0
        %v526 = vmax.f32 %v524, 0.0
        %s527 = scalar_lea.vmem [#allocation7], 4
        %v528 = vld [vmem:[%s527] sm:$0xf]
        %s529 = scalar_lea.vmem %s5, 4
        %v530 = vld [vmem:[%s529] sm:$0xf]
        %532 = vset.pattern.permute.xlu0 0
        %533 = vperm.xlu0 %532, %v530
        %v534 = vpop.permute.xlu0 %533
        %v537 = vsel %vm407, %v528, 0
        %539 = vmatpush.msra.mxu0 0.0
        %540 = vmatpush.msra.mxu0 0.0
        %541 = vmatpush.msra.mxu0 0.0
        %542 = vmatpush.msra.mxu0 0.0
        %543 = vmatpush.msra.mxu0 0.0
        %544 = vmatpush.msra.mxu0 0.0
        %545 = vmatpush.msra.mxu0 0.0
        %546 = vmatpush.msra.mxu0 0.0
        %547 = vmatpush.msra.mxu0 0.0
        %548 = vmatpush.msra.mxu0 0.0
        %549 = vmatpush.msra.mxu0 0.0
        %550 = vmatpush.msra.mxu0 0.0
        %551 = vmatpush.msra.mxu0 0.0
        %552 = vmatpush.msra.mxu0 0.0
        %553 = vmatpush.msra.mxu0 0.0
        %554 = vmatpush.msra.mxu0 %v447
        %555 = vmatmul.f32.gmra.mxu0 %v537
        %v556 = vpop.f32.mrf.mxu0
        %v557 = vadd.f32 %v534, %v556
        %558 = vdwg.mxu0
        %v559 = vmax.f32 %v557, 0.0
        %s560 = scalar_lea.vmem %s382, 4 [#allocation10]
        %v561 = vld [vmem:[%s560] sm:$0xf]
        %562 = vmatpush.xpose.msra.mxu0 0.0
        %563 = vmatpush.xpose.msra.mxu0 0.0
        %564 = vmatpush.xpose.msra.mxu0 0.0
        %565 = vmatpush.xpose.msra.mxu0 0.0
        %566 = vmatpush.xpose.msra.mxu0 0.0
        %567 = vmatpush.xpose.msra.mxu0 0.0
        %568 = vmatpush.xpose.msra.mxu0 0.0
        %569 = vmatpush.xpose.msra.mxu0 0.0
        %570 = vmatpush.xpose.msra.mxu0 0.0
        %571 = vmatpush.xpose.msra.mxu0 0.0
        %572 = vmatpush.xpose.msra.mxu0 0.0
        %573 = vmatpush.xpose.msra.mxu0 0.0
        %574 = vmatpush.xpose.msra.mxu0 0.0
        %575 = vmatpush.xpose.msra.mxu0 0.0
        %576 = vmatpush.xpose.msra.mxu0 0.0
        %577 = vmatpush.xpose.msra.mxu0 %v559
        %578 = vmatmul.f32.gmra.mxu0 %v526
        %v579 = vpop.f32.mrf.mxu0
        %v580 = vadd.f32 0.0, %v579
        %581 = vdwg.mxu0
        %v582 = vadd.f32 %v561, %v580
        %583 = vst.msk [vmem:[%s560] sm:$0xf] %vm492, %v582
        %p584 = scmp.eq.s32.totalorder %s31, 1
        // Predicated region
        $region69: #{tpu_custom_call.1} parent=47 // pred_check
          %p585 = pneg %p584
        $region70: #{tpu_custom_call.1} parent=47 // pred_check_branch
          %587 = sbr.rel (%p585) target = $region72
        $region71: #{tpu_custom_call.1} parent=47 // pred_region
          %v588 = vld [vmem:[%s382] sm:$0xf]
          %v589 = vmul.f32 %v588, 0.5
          %v590 = vsel %vm492, %v589, -inf
          %591 = vmax.xlane.f32.xlu0 %v590
          %v592 = vpop.xlane.xlu0 %591
          %v593 = vsub.f32 %v589, %v592
          %v594 = vmul.f32 %v593, 1.442695
          %v595 = vpow.pop %v594
          %v596 = vsel %vm492, %v595, 0.0
          %597 = vadd.xlane.f32.xlu0 %v596
          %v598 = vpop.xlane.xlu0 %597
          %v599 = vrcp.pop %v598
          %v600 = vmul.f32 %v598, %v599
          %v601 = vsub.f32 1.0, %v600
          %v602 = vmul.f32 %v599, %v601
          %v603 = vadd.f32 %v599, %v602
          %vm604 = vweird.f32 %v598
          %vm605 = vweird.f32 %v599
          %vm606 = vmor %vm604, %vm605
          %v607 = vsel %vm606, %v599, %v603
          %v608 = vand.u32 2147483647, %v598
          %vm609 = vcmp.eq.f32.partialorder %v608, 8.507059e+37
          %v610 = vand.u32 %v598, 2147483648
          %v611 = vor.u32 1.1754944e-38, %v610
          %v612 = vsel %vm609, %v611, %v607
          %v613 = vmul.f32 %v595, %v612
          %v614 = vld [vmem:[#allocation8] sm:$0xf]
          %v616 = vsel %vm407, %v614, 0
          %v619 = vsel %vm411, %v613, 0
          %621 = vmatpush.msra.mxu0 0.0
          %622 = vmatpush.msra.mxu0 0.0
          %623 = vmatpush.msra.mxu0 0.0
          %624 = vmatpush.msra.mxu0 0.0
          %625 = vmatpush.msra.mxu0 0.0
          %626 = vmatpush.msra.mxu0 0.0
          %627 = vmatpush.msra.mxu0 0.0
          %628 = vmatpush.msra.mxu0 0.0
          %629 = vmatpush.msra.mxu0 0.0
          %630 = vmatpush.msra.mxu0 0.0
          %631 = vmatpush.msra.mxu0 0.0
          %632 = vmatpush.msra.mxu0 0.0
          %633 = vmatpush.msra.mxu0 0.0
          %634 = vmatpush.msra.mxu0 0.0
          %635 = vmatpush.msra.mxu0 0.0
          %636 = vmatpush.msra.mxu0 %v619
          %637 = vmatmul.f32.gmra.mxu0 %v616
          %v638 = vpop.f32.mrf.mxu0
          %v639 = vadd.f32 0.0, %v638
          %640 = vdwg.mxu0
          %641 = vst.msk [vmem:[%s382] sm:$0xf] %vm492, %v639
          %v642 = vld [vmem:[%s560] sm:$0xf]
          %v643 = vmul.f32 %v642, 0.5
          %v644 = vsel %vm492, %v643, -inf
          %645 = vmax.xlane.f32.xlu0 %v644
          %v646 = vpop.xlane.xlu0 %645
          %v647 = vsub.f32 %v643, %v646
          %v648 = vmul.f32 %v647, 1.442695
          %v649 = vpow.pop %v648
          %v650 = vsel %vm492, %v649, 0.0
          %651 = vadd.xlane.f32.xlu0 %v650
          %v652 = vpop.xlane.xlu0 %651
          %v653 = vrcp.pop %v652
          %v654 = vmul.f32 %v652, %v653
          %v655 = vsub.f32 1.0, %v654
          %v656 = vmul.f32 %v653, %v655
          %v657 = vadd.f32 %v653, %v656
          %vm658 = vweird.f32 %v652
          %vm659 = vweird.f32 %v653
          %vm660 = vmor %vm658, %vm659
          %v661 = vsel %vm660, %v653, %v657
          %v662 = vand.u32 2147483647, %v652
          %vm663 = vcmp.eq.f32.partialorder %v662, 8.507059e+37
          %v664 = vand.u32 %v652, 2147483648
          %v665 = vor.u32 1.1754944e-38, %v664
          %v666 = vsel %vm663, %v665, %v661
          %v667 = vmul.f32 %v649, %v666
          %v668 = vld [vmem:[#allocation8] sm:$0xf]
          %v670 = vsel %vm407, %v668, 0
          %v673 = vsel %vm411, %v667, 0
          %675 = vmatpush.msra.mxu0 0.0
          %676 = vmatpush.msra.mxu0 0.0
          %677 = vmatpush.msra.mxu0 0.0
          %678 = vmatpush.msra.mxu0 0.0
          %679 = vmatpush.msra.mxu0 0.0
          %680 = vmatpush.msra.mxu0 0.0
          %681 = vmatpush.msra.mxu0 0.0
          %682 = vmatpush.msra.mxu0 0.0
          %683 = vmatpush.msra.mxu0 0.0
          %684 = vmatpush.msra.mxu0 0.0
          %685 = vmatpush.msra.mxu0 0.0
          %686 = vmatpush.msra.mxu0 0.0
          %687 = vmatpush.msra.mxu0 0.0
          %688 = vmatpush.msra.mxu0 0.0
          %689 = vmatpush.msra.mxu0 0.0
          %690 = vmatpush.msra.mxu0 %v673
          %691 = vmatmul.f32.gmra.mxu0 %v670
          %v692 = vpop.f32.mrf.mxu0
          %v693 = vadd.f32 0.0, %v692
          %694 = vdwg.mxu0
          %695 = vst.msk [vmem:[%s560] sm:$0xf] %vm492, %v693
        $region72: #{tpu_custom_call.1} parent=47 // pred_fallthru
          _
        %s696 = sand.u32 %s207, 1
        %s697 = scalar_lea.sflag [#allocation4], %s696
        %s698 = sand.u32 %s207, 1
        %s699 = smul.addr %s698, 8
        %s700 = scalar_lea.vmem [#allocation10], %s699
        // Predicated region
        $region73: #{tpu_custom_call.1} parent=47 // pred_check
          %p701 = pneg %p217
        $region74: #{tpu_custom_call.1} parent=47 // pred_check_branch
          %703 = sbr.rel (%p701) target = $region76
        $region75: #{tpu_custom_call.1} parent=47 // pred_region
          %705 = vsyncadd %s697, 0
          %s706 = smul.addr %s30, 2
          %s707 = smul.addr %s706, 4
          %s708 = scalar_lea.hbm %s7, %s707
          %s709 = sshll.u32 %s700, 4
          %s710 = int_to_ptr.vmem [resolvable:$true] %s709
          %s711 = sshll.u32 %s708, 4
          %s712 = int_to_ptr.hbm [resolvable:$true] %s711
          %717 = dma.vmem_to_hbm [thread:$0]  %s710, 128, %s712, %s697, 64, 64, 4
        $region76: #{tpu_custom_call.1} parent=47 // pred_fallthru
          _
      $region48: #{tpu_custom_call.1} parent=5 // pred_fallthru
        _
      %p718 = scmp.le.s32.totalorder 2, %s21
      // Predicated region
      $region77: #{tpu_custom_call.1} parent=5 // pred_check
        %p719 = pneg %p718
      $region78: #{tpu_custom_call.1} parent=5 // pred_check_branch
        %721 = sbr.rel (%p719) target = $region80
      $region79: #{tpu_custom_call.1} parent=5 // pred_region
        %s722 = ssub.s32 %s21, 2
        // Predicated region
        $region81: #{tpu_custom_call.1} parent=79 // pred_check
          %p723 = pneg %p223
        $region82: #{tpu_custom_call.1} parent=79 // pred_check_branch
          %725 = sbr.rel (%p723) target = $region84
        $region83: #{tpu_custom_call.1} parent=79 // pred_region
          %s726 = sand.u32 %s208, 1
          %s727 = scalar_lea.sflag [#allocation4], %s726
          %s728 = sand.u32 %s208, 1
          %s729 = smul.addr %s728, 8
          %s730 = scalar_lea.vmem [#allocation10], %s729
          %732 = dma.done %s727, 128
        $region84: #{tpu_custom_call.1} parent=79 // pred_fallthru
          _
      $region80: #{tpu_custom_call.1} parent=5 // pred_fallthru
        _
    $region6: #{tpu_custom_call.1} parent=1 // loop_footer
      %s25 = sadd.s32 1, %s21
    $region7: #{tpu_custom_call.1} parent=1 // loop_footer_branch
      %20 = sbr.rel target = $region3
    $region8: #{tpu_custom_call.1} parent=1 // loop_exit
      _
    %733 = vsyncpa [#allocation3], 1
    %s734 = scalar_lea.sflag [#allocation3], 1
    %735 = vsyncpa %s734, 1
    %736 = vsyncpa [#allocation6], 1
    %737 = vsyncpa [#allocation9], 1
    %738 = vsyncpa [#allocation4], 1
    %s739 = scalar_lea.sflag [#allocation4], 1
    %740 = vsyncpa %s739, 1

</llo_original>
